<compile_context>
chip_gen: v5e
topology: v5e:2x2
jax: 0.10.0
libtpu: 0.0.40
codegen_flags: <defaults>
</compile_context>

<pallas_src>
import itertools

import numpy as np
import jax
import jax.numpy as jnp
from jax.experimental import pallas as pl
from jax.experimental.pallas import tpu as pltpu


# ----------------------------------------------------------------------------
# Pallas cost-matrix kernel
# ----------------------------------------------------------------------------
_BT_MAX = 512    # target-axis tile (lanes of the cost matrix)
_BP_MAX = 1024   # sampled-point reduction tile

_DUMMY_BOX8 = np.array([0.25, 0.25, 0.5, 0.5, 0.0, 0.0, 0.5, 0.5], np.float32)


def _cost_kernel(w_ref,                 # SMEM (4,) f32: [w_mask/num_points, w_dice, w_box, w_giou]
                 om_ref,                # (Qp, bp)  bf16 mask logits at sampled points
                 tmt_ref,               # (bp, bt)  bf16 target masks at sampled points (transposed)
                 ob_ref,                # (Qp, 8)   f32  [cx,cy,w,h,x0,y0,x1,y1] per query
                 tb_ref,                # (8, bt)   f32  same, per target (transposed)
                 c_ref,                 # (Qp, bt)  f32  output cost tile
                 acc_ref,               # (2*Qp+8, bt) f32 matmul accumulator
                 bsum_ref,              # (Qp, 1) f32 rowsum of softplus(logits)
                 ssum_ref):             # (Qp, 1) f32 rowsum of sigmoid(logits)
    f32 = jnp.float32
    Qp = om_ref.shape[0]
    p_idx = pl.program_id(2)
    n_p = pl.num_programs(2)

    @pl.when(p_idx == 0)
    def _init():
        acc_ref[...] = jnp.zeros_like(acc_ref)
        bsum_ref[...] = jnp.zeros_like(bsum_ref)
        ssum_ref[...] = jnp.zeros_like(ssum_ref)

    om_bf = om_ref[...]                              # bf16
    om = om_bf.astype(f32)

    # shared transcendental: e = exp(-|x|) feeds both softplus and sigmoid
    e = jnp.exp(-jnp.abs(om))
    base = jnp.maximum(om, 0.0) + jnp.log1p(e)       # softplus(x) = BCEWithLogits(x, target=0)
    inv1pe = pl.reciprocal(1.0 + e, approx=True)
    sig = jnp.where(om >= 0.0, inv1pe, e * inv1pe)   # sigmoid(x)

    # padded points were filled with -30 -> base, sig ~ 0 there (no masking needed)
    bsum_ref[...] += jnp.sum(base, axis=1, keepdims=True)
    ssum_ref[...] += jnp.sum(sig, axis=1, keepdims=True)

    # single stacked MXU matmul: [logits ; sigmoid(logits) ; ones] @ tgt_mask^T
    ones8 = jnp.ones((8, om_bf.shape[1]), jnp.bfloat16)
    lhs = jnp.concatenate([om_bf, sig.astype(jnp.bfloat16), ones8], axis=0)
    acc_ref[...] += jnp.dot(lhs, tmt_ref[...], preferred_element_type=f32)

    @pl.when(p_idx == n_p - 1)
    def _finalize():
        w_mask = w_ref[0]          # already divided by num_points on the host
        w_dice = w_ref[1]
        w_box = w_ref[2]
        w_giou = w_ref[3]

        dot_om = acc_ref[0:Qp, :]                         # logits @ tgt_mask^T
        dot_sig = acc_ref[Qp:2 * Qp, :]                   # sigmoid(logits) @ tgt_mask^T
        colsum = acc_ref[2 * Qp:2 * Qp + 8, :][0:1, :]    # (1, bt) per-target mask area

        # batch sigmoid-CE:  sum_p[softplus(x) - x*t] == rowsum(softplus(x)) - x@t
        ce = bsum_ref[...] - dot_om
        # batch dice: 1 - (2*sig@t + 1) / (sum(sig) + sum(t) + 1)
        den = ssum_ref[...] + colsum + 1.0
        dice = 1.0 - (2.0 * dot_sig + 1.0) * pl.reciprocal(den, approx=True)

        # ---- box L1 cost (cdist p=1 on cxcywh) ----
        ob = ob_ref[...]
        tb = tb_ref[...]
        cost_bbox = (jnp.abs(ob[:, 0:1] - tb[0:1, :]) + jnp.abs(ob[:, 1:2] - tb[1:2, :]) +
                     jnp.abs(ob[:, 2:3] - tb[2:3, :]) + jnp.abs(ob[:, 3:4] - tb[3:4, :]))

        # ---- generalized box IoU (xyxy precomputed on host) ----
        ox0, oy0, ox1, oy1 = ob[:, 4:5], ob[:, 5:6], ob[:, 6:7], ob[:, 7:8]
        tx0, ty0, tx1, ty1 = tb[4:5, :], tb[5:6, :], tb[6:7, :], tb[7:8, :]
        area_o = (ox1 - ox0) * (oy1 - oy0)
        area_t = (tx1 - tx0) * (ty1 - ty0)
        iw = jnp.maximum(jnp.minimum(ox1, tx1) - jnp.maximum(ox0, tx0), 0.0)
        ih = jnp.maximum(jnp.minimum(oy1, ty1) - jnp.maximum(oy0, ty0), 0.0)
        inter = iw * ih
        union = area_o + area_t - inter
        ew = jnp.maximum(jnp.maximum(ox1, tx1) - jnp.minimum(ox0, tx0), 0.0)
        eh = jnp.maximum(jnp.maximum(oy1, ty1) - jnp.minimum(oy0, ty0), 0.0)
        area_e = ew * eh
        inv_union = pl.reciprocal(jnp.maximum(union, 1e-7), approx=True)
        inv_area_e = pl.reciprocal(jnp.maximum(area_e, 1e-7), approx=True)
        iou = inter * inv_union
        giou = iou - (area_e - union) * inv_area_e

        c_ref[...] = (w_mask * ce + w_dice * dice +
                      w_box * cost_bbox + w_giou * (-giou)).astype(c_ref.dtype)


@jax.jit
def _padded_cost(w, om, tmt, ob8, tb8):
    """om: (B,Qp,Pp) bf16; tmt: (B,Pp,Tp) bf16; ob8: (B,Qp,8) f32; tb8: (B,8,Tp) f32."""
    B, Qp, Pp = om.shape
    Tp = tmt.shape[2]
    bt = Tp if Tp <= _BT_MAX else _BT_MAX
    bp = Pp if Pp <= _BP_MAX else _BP_MAX
    assert Tp % bt == 0 and Pp % bp == 0

    grid_spec = pltpu.PrefetchScalarGridSpec(
        num_scalar_prefetch=1,
        grid=(B, Tp // bt, Pp // bp),
        in_specs=[
            pl.BlockSpec((None, Qp, bp), lambda b, t, p, w_: (b, 0, p)),
            pl.BlockSpec((None, bp, bt), lambda b, t, p, w_: (b, p, t)),
            pl.BlockSpec((None, Qp, 8), lambda b, t, p, w_: (b, 0, 0)),
            pl.BlockSpec((None, 8, bt), lambda b, t, p, w_: (b, 0, t)),
        ],
        out_specs=pl.BlockSpec((None, Qp, bt), lambda b, t, p, w_: (b, 0, t)),
        scratch_shapes=[
            pltpu.VMEM((2 * Qp + 8, bt), jnp.float32),
            pltpu.VMEM((Qp, 1), jnp.float32),
            pltpu.VMEM((Qp, 1), jnp.float32),
        ],
    )
    return pl.pallas_call(
        _cost_kernel,
        out_shape=jax.ShapeDtypeStruct((B, Qp, Tp), jnp.float32),
        grid_spec=grid_spec,
        compiler_params=pltpu.CompilerParams(
            dimension_semantics=("parallel", "parallel", "arbitrary"),
            vmem_limit_bytes=40 * 1024 * 1024,
        ),
    )(w, om, tmt, ob8, tb8)


def _round_up(x, m):
    return (x + m - 1) // m * m


def _pad_dim(n, tile_max):
    p = max(_round_up(n, 128), 128)
    if p > tile_max:
        p = _round_up(p, tile_max)
    return p


def _box_slab(boxes_cxcywh, n_pad):
    """(N,4) cxcywh -> (n_pad,8) [cx,cy,w,h,x0,y0,x1,y1], padded with a valid dummy box."""
    b = jnp.asarray(boxes_cxcywh, jnp.float32)
    cx, cy, w, h = b[:, 0], b[:, 1], b[:, 2], b[:, 3]
    slab = jnp.stack([cx, cy, w, h,
                      cx - 0.5 * w, cy - 0.5 * h,
                      cx + 0.5 * w, cy + 0.5 * h], axis=1)
    out = jnp.broadcast_to(jnp.asarray(_DUMMY_BOX8), (n_pad, 8))
    return out.at[:b.shape[0], :].set(slab)


def pallas_cost_matrix_batched(out_pts_list, tgt_pts_list, out_bbox_list, tgt_bbox_list,
                               w_mask, w_dice, w_box, w_giou):
    """All batch items in ONE pallas_call.  Returns device array C (B, Qp, Tp) plus padded dims.

    C[b, q, t] = w_mask*CE + w_dice*dice + w_box*L1 + w_giou*(-GIoU)  (valid region only).
    """
    B = len(out_pts_list)
    Q, P = out_pts_list[0].shape
    T_max = max(t.shape[0] for t in tgt_pts_list)
    Qp = max(_round_up(Q, 8), 8)
    Pp = _pad_dim(P, _BP_MAX)
    Tp = _pad_dim(T_max, _BT_MAX)

    om_list, tmt_list, ob_list, tb_list = [], [], [], []
    for b in range(B):
        # mask logits: bf16, padded with a large negative so softplus/sigmoid of padding ~ 0
        om = jnp.full((Qp, Pp), -30.0, jnp.bfloat16)
        om = om.at[:Q, :P].set(jnp.asarray(out_pts_list[b]).astype(jnp.bfloat16))
        om_list.append(om)
        # target masks: transposed (points, targets), zero-padded, bf16
        tgt = jnp.asarray(tgt_pts_list[b], jnp.float32)
        tmt = jnp.zeros((Pp, Tp), jnp.bfloat16)
        tmt = tmt.at[:P, :tgt.shape[0]].set(tgt.astype(jnp.bfloat16).T)
        tmt_list.append(tmt)
        ob_list.append(_box_slab(out_bbox_list[b], Qp))        # (Qp, 8)
        tb_list.append(_box_slab(tgt_bbox_list[b], Tp).T)      # (8, Tp)

    om = jnp.stack(om_list)        # (B, Qp, Pp)
    tmt = jnp.stack(tmt_list)      # (B, Pp, Tp)
    ob8 = jnp.stack(ob_list)       # (B, Qp, 8)
    tb8 = jnp.stack(tb_list)       # (B, 8, Tp)

    # runtime SMEM scalars (no recompile per weight setting); 1/num_points folded into CE weight
    w = jnp.array([float(w_mask) / float(max(P, 1)),
                   float(w_dice), float(w_box), float(w_giou)], jnp.float32)

    return _padded_cost(w, om, tmt, ob8, tb8)


# ----------------------------------------------------------------------------
# Host/JAX glue: point_sample (bilinear, align_corners=False, zero padding)
# ----------------------------------------------------------------------------
def point_sample(img, coords):
    """img: [N, C, H, W]; coords: [N, P, 2] in [0,1], (x, y) order.  Returns [N, C, P]."""
    N, C, H, W = img.shape
    x = coords[..., 0] * W - 0.5
    y = coords[..., 1] * H - 0.5
    x0 = jnp.floor(x)
    y0 = jnp.floor(y)

    def gather(ix, iy):
        valid = ((ix >= 0) & (ix <= W - 1) & (iy >= 0) & (iy <= H - 1)).astype(img.dtype)
        ixc = jnp.clip(ix, 0, W - 1).astype(jnp.int32)
        iyc = jnp.clip(iy, 0, H - 1).astype(jnp.int32)
        vals = jax.vmap(lambda im, yy, xx: im[:, yy, xx])(img, iyc, ixc)  # [N, C, P]
        return vals * valid[:, None, :]

    wx1 = x - x0
    wx0 = 1.0 - wx1
    wy1 = y - y0
    wy0 = 1.0 - wy1
    out = (gather(x0, y0) * (wx0 * wy0)[:, None, :] +
           gather(x0 + 1, y0) * (wx1 * wy0)[:, None, :] +
           gather(x0, y0 + 1) * (wx0 * wy1)[:, None, :] +
           gather(x0 + 1, y0 + 1) * (wx1 * wy1)[:, None, :])
    return out


# ----------------------------------------------------------------------------
# Host glue: exact linear sum assignment (small problems)
# ----------------------------------------------------------------------------
def _linear_sum_assignment(D):
    # TODO(synk): scipy's Hungarian algorithm has no Pallas equivalent; exact brute force on host.
    nr, nc = D.shape
    if nr <= nc:
        best_cost, best = np.inf, None
        rng = np.arange(nr)
        for perm in itertools.permutations(range(nc), nr):
            c = D[rng, list(perm)].sum()
            if c < best_cost:
                best_cost, best = c, perm
        return rng.astype(np.int64), np.asarray(best, dtype=np.int64)
    else:
        cols_t, rows_t = _linear_sum_assignment(D.T)
        rows, cols = rows_t, cols_t
        order = np.argsort(rows)
        return rows[order].astype(np.int64), cols[order].astype(np.int64)


# ----------------------------------------------------------------------------
# Matcher
# ----------------------------------------------------------------------------
class HungarianMatcherMany2ManyPallas:
    def __init__(self, cost_class=1.0, cost_mask=1.0, cost_dice=1.0, num_points=0,
                 cost_box=0.0, cost_giou=0.0, panoptic_on=False, num_mask_tokens=3):
        self.cost_class = cost_class
        self.cost_mask = cost_mask
        self.cost_dice = cost_dice
        self.cost_box = cost_box
        self.cost_giou = cost_giou
        self.panoptic_on = panoptic_on
        assert cost_class != 0 or cost_mask != 0 or cost_dice != 0, "all costs cant be 0"
        self.num_points = num_points
        self.num_mask_tokens = num_mask_tokens

    def memory_efficient_forward(self, outputs, targets, key, cost=("cls", "box", "mask")):
        if "box" in cost:
            bs, num_queries = outputs["pred_boxes"].shape[:2]
        elif "mask" in cost:
            bs, num_queries = outputs["pred_masks"].shape[:2]
        nmt = self.num_mask_tokens

        out_pts_list, tgt_pts_list, out_box_list, tgt_box_list = [], [], [], []
        meta = []   # (rows, cols, num_tgt) per batch item
        for b in range(bs):
            level_target_inds = targets[b]["level_target_inds"]
            max_num_tgt_per_click = targets[b]["max_num_tgt_per_click"]
            assert max_num_tgt_per_click <= nmt, "targets exceed prediction number"
            len_level = [len(inds) for inds in level_target_inds]
            cum = np.concatenate([[0], np.cumsum(len_level)]).astype(np.int64)
            rows = np.concatenate(
                [np.repeat(np.arange(i * nmt, (i + 1) * nmt), n) for i, n in enumerate(len_level)]
            ).astype(np.int64)
            cols = np.concatenate(
                [np.tile(np.arange(cum[i], cum[i + 1]), nmt) for i in range(len(len_level))]
            ).astype(np.int64)
            flat_inds = np.array([ind for inds in level_target_inds for ind in inds], dtype=np.int64)
            num_tgt = len(flat_inds)
            meta.append((rows, cols, num_tgt))

            if "box" in cost:
                out_bbox = outputs["pred_boxes"][b]
                tgt_bbox = targets[b]["ori_boxes"][flat_inds]
            else:
                out_bbox = jnp.broadcast_to(jnp.array([0.25, 0.25, 0.5, 0.5], jnp.float32),
                                            (num_queries, 4))
                tgt_bbox = jnp.broadcast_to(jnp.array([0.25, 0.25, 0.5, 0.5], jnp.float32),
                                            (num_tgt, 4))
            out_box_list.append(out_bbox)
            tgt_box_list.append(tgt_bbox)

            if "mask" in cost:
                out_mask = outputs["pred_masks"][b]                       # [nq, H, W]
                ori_masks = targets[b]["ori_masks"].astype(out_mask.dtype)
                tgt_mask = ori_masks[flat_inds]                           # [nt, H, W]
                key, sub = jax.random.split(key)
                point_coords = jax.random.uniform(sub, (1, self.num_points, 2),
                                                  dtype=tgt_mask.dtype)
                tgt_pts = point_sample(tgt_mask[:, None],
                                       jnp.tile(point_coords, (tgt_mask.shape[0], 1, 1)))[:, 0, :]
                out_pts = point_sample(out_mask[:, None],
                                       jnp.tile(point_coords, (out_mask.shape[0], 1, 1)))[:, 0, :]
            else:
                out_pts = jnp.zeros((num_queries, max(self.num_points, 1)), jnp.float32)
                tgt_pts = jnp.zeros((num_tgt, max(self.num_points, 1)), jnp.float32)
            out_pts_list.append(out_pts)
            tgt_pts_list.append(tgt_pts)

        w_box = self.cost_box if "box" in cost else 0.0
        w_giou = self.cost_giou if "box" in cost else 0.0
        w_mask = self.cost_mask if "mask" in cost else 0.0
        w_dice = self.cost_dice if "mask" in cost else 0.0

        # ---- Pallas hot path: ONE kernel launch for the whole batch ----
        C_all = pallas_cost_matrix_batched(out_pts_list, tgt_pts_list,
                                           out_box_list, tgt_box_list,
                                           w_mask, w_dice, w_box, w_giou)
        C_all = np.asarray(jax.block_until_ready(C_all), dtype=np.float32)  # (bs, Qp, Tp)

        indices = []
        for b in range(bs):
            rows, cols, num_tgt = meta[b]
            C = C_all[b, :num_queries, :num_tgt]
            D = np.full_like(C, 1e6)
            D[rows, cols] = C[rows, cols]
            D = D.reshape(num_queries, -1)
            indices.append(_linear_sum_assignment(D))
        return [(np.asarray(i, dtype=np.int64), np.asarray(j, dtype=np.int64)) for i, j in indices]

    def forward(self, outputs, targets, key, cost=("cls", "box", "mask"), mode="default", extra=None):
        if mode == "default":
            return self.memory_efficient_forward(outputs, targets, key, cost)
        raise AssertionError("Mode {} is not supported.".format(mode))


# ----------------------------------------------------------------------------
# Demo
# ----------------------------------------------------------------------------
if __name__ == "__main__":
    key = jax.random.PRNGKey(0)
    bs = 2
    num_mask_tokens = 3
    num_levels = 2
    num_queries = num_levels * num_mask_tokens          # 6
    H = W = 16
    num_points = 128

    k1, k2, k3, k4, k5, key = jax.random.split(key, 6)

    # predictions
    cxcy = 0.2 + 0.6 * jax.random.uniform(k1, (bs, num_queries, 2), jnp.float32)
    wh = 0.1 + 0.4 * jax.random.uniform(k2, (bs, num_queries, 2), jnp.float32)
    pred_boxes = jnp.concatenate([cxcy, wh], axis=-1)                    # [2, 6, 4] cxcywh
    pred_masks = jax.random.normal(k3, (bs, num_queries, H, W), jnp.float32)
    outputs = {"pred_boxes": pred_boxes, "pred_masks": pred_masks}

    # targets
    level_target_inds_all = [[[0, 1], [2, 3, 4]], [[0], [1, 2]]]
    targets = []
    tk = k4
    for b in range(bs):
        lvls = level_target_inds_all[b]
        n_ori = sum(len(l) for l in lvls)
        tk, ka, kb = jax.random.split(tk, 3)
        tcxcy = 0.2 + 0.6 * jax.random.uniform(ka, (n_ori, 2), jnp.float32)
        twh = 0.1 + 0.4 * jax.random.uniform(ka, (n_ori, 2), jnp.float32)
        ori_boxes = jnp.concatenate([tcxcy, twh], axis=-1)
        ori_masks = (jax.random.uniform(kb, (n_ori, H, W), jnp.float32) > 0.5).astype(jnp.float32)
        targets.append({
            "level_target_inds": lvls,
            "max_num_tgt_per_click": max(len(l) for l in lvls),
            "ori_boxes": ori_boxes,
            "ori_masks": ori_masks,
        })

    matcher = HungarianMatcherMany2ManyPallas(
        cost_class=1.0, cost_mask=1.0, cost_dice=1.0, num_points=num_points,
        cost_box=1.0, cost_giou=1.0, num_mask_tokens=num_mask_tokens)

    indices = matcher.forward(outputs, targets, k5, cost=("cls", "box", "mask"))

    # sanity: each batch element yields min(num_queries, num_targets) matched pairs
    for b, (i, j) in enumerate(indices):
        n_tgt = sum(len(l) for l in targets[b]["level_target_inds"])
        assert len(i) == len(j) == min(num_queries, n_tgt)
        assert np.all(i >= 0) and np.all(i < num_queries)
        assert np.all(j >= 0) and np.all(j < n_tgt)

    print("KERNEL_OK")
</pallas_src>

<mosaic_0001>
module attributes {stable_mosaic.version = 11 : i64} {
  func.func @_cost_kernel(%arg0: i32, %arg1: i32, %arg2: i32, %arg3: memref<4xf32, #tpu.memory_space<smem>>, %arg4: memref<1x8x128xbf16, #tpu.memory_space<vmem>>, %arg5: memref<1x128x128xbf16, #tpu.memory_space<vmem>>, %arg6: memref<1x8x8xf32, #tpu.memory_space<vmem>>, %arg7: memref<1x8x128xf32, #tpu.memory_space<vmem>>, %arg8: memref<1x8x128xf32, #tpu.memory_space<vmem>>, %arg9: memref<24x128xf32, #tpu.memory_space<vmem>>, %arg10: memref<8x1xf32, #tpu.memory_space<vmem>>, %arg11: memref<8x1xf32, #tpu.memory_space<vmem>>) attributes {dimension_semantics = [#tpu.dimension_semantics<parallel>, #tpu.dimension_semantics<parallel>, #tpu.dimension_semantics<arbitrary>], iteration_bounds = array<i64: 2, 1, 1>, scalar_prefetch = 1 : i64, scratch_operands = 3 : i64, tpu.core_type = #tpu.core_type<tc>, window_params = [{transform_indices = @transform_0, window_bounds = array<i64: 1, 8, 128>}, {transform_indices = @transform_1, window_bounds = array<i64: 1, 128, 128>}, {transform_indices = @transform_2, window_bounds = array<i64: 1, 8, 8>}, {transform_indices = @transform_3, window_bounds = array<i64: 1, 8, 128>}, {transform_indices = @transform_4, window_bounds = array<i64: 1, 8, 128>}]} {
    %c0_i32 = arith.constant 0 : i32
    %0 = arith.cmpi eq, %arg2, %c0_i32 : i32
    %1 = arith.extui %0 : i1 to i32
    %c0_i32_0 = arith.constant 0 : i32
    %2 = arith.cmpi ne, %1, %c0_i32_0 : i32
    scf.if %2 {
      %cst_27 = arith.constant 0.000000e+00 : f32
      %43 = vector.broadcast %cst_27 : f32 to vector<24x128xf32>
      %c0_28 = arith.constant 0 : index
      %c0_29 = arith.constant 0 : index
      %44 = vector.load %arg9[%c0_28, %c0_29] : memref<24x128xf32, #tpu.memory_space<vmem>>, vector<24x128xf32>
      tpu.vector_store %arg9[%c0_28, %c0_29], %43 {strides = array<i32>} : memref<24x128xf32, #tpu.memory_space<vmem>>, vector<24x128xf32>,
      %cst_30 = arith.constant 0.000000e+00 : f32
      %45 = vector.broadcast %cst_30 : f32 to vector<8x1xf32>
      %c0_31 = arith.constant 0 : index
      %c0_32 = arith.constant 0 : index
      %46 = vector.load %arg10[%c0_31, %c0_32] : memref<8x1xf32, #tpu.memory_space<vmem>>, vector<8x1xf32>
      tpu.vector_store %arg10[%c0_31, %c0_32], %45 {strides = array<i32>} : memref<8x1xf32, #tpu.memory_space<vmem>>, vector<8x1xf32>,
      %cst_33 = arith.constant 0.000000e+00 : f32
      %47 = vector.broadcast %cst_33 : f32 to vector<8x1xf32>
      %c0_34 = arith.constant 0 : index
      %c0_35 = arith.constant 0 : index
      %48 = vector.load %arg11[%c0_34, %c0_35] : memref<8x1xf32, #tpu.memory_space<vmem>>, vector<8x1xf32>
      tpu.vector_store %arg11[%c0_34, %c0_35], %47 {strides = array<i32>} : memref<8x1xf32, #tpu.memory_space<vmem>>, vector<8x1xf32>,
    } else {
    }
    %c0 = arith.constant 0 : index
    %c0_1 = arith.constant 0 : index
    %c0_2 = arith.constant 0 : index
    %3 = vector.load %arg4[%c0, %c0_1, %c0_2] : memref<1x8x128xbf16, #tpu.memory_space<vmem>>, vector<1x8x128xbf16>
    %4 = vector.shape_cast %3 : vector<1x8x128xbf16> to vector<8x128xbf16>
    %5 = arith.extf %4 : vector<8x128xbf16> to vector<8x128xf32>
    %6 = math.absf %5 : vector<8x128xf32>
    %cst = arith.constant 0.000000e+00 : f32
    %7 = vector.broadcast %cst : f32 to vector<8x128xf32>
    %8 = arith.subf %7, %6 : vector<8x128xf32>
    %9 = math.exp %8 : vector<8x128xf32>
    %cst_3 = arith.constant 0.000000e+00 : f32
    %10 = vector.broadcast %cst_3 : f32 to vector<8x128xf32>
    %11 = arith.maximumf %5, %10 : vector<8x128xf32>
    %12 = math.log1p %9 : vector<8x128xf32>
    %13 = arith.addf %11, %12 : vector<8x128xf32>
    %cst_4 = arith.constant 1.000000e+00 : f32
    %14 = vector.broadcast %cst_4 : f32 to vector<8x128xf32>
    %15 = arith.addf %14, %9 : vector<8x128xf32>
    %16 = tpu.reciprocal %15 {approx = true} : vector<8x128xf32> -> vector<8x128xf32>
    %cst_5 = arith.constant 0.000000e+00 : f32
    %17 = vector.broadcast %cst_5 : f32 to vector<8x128xf32>
    %18 = arith.cmpf oge, %5, %17 : vector<8x128xf32>
    %19 = arith.mulf %9, %16 : vector<8x128xf32>
    %20 = arith.select %18, %16, %19 : vector<8x128xi1>, vector<8x128xf32>
    %c0_6 = arith.constant 0 : index
    %c0_7 = arith.constant 0 : index
    %21 = vector.load %arg10[%c0_6, %c0_7] : memref<8x1xf32, #tpu.memory_space<vmem>>, vector<8x1xf32>
    %cst_8 = arith.constant dense<0.000000e+00> : vector<8xf32>
    %22 = vector.multi_reduction <add>, %13, %cst_8 [1] : vector<8x128xf32> to vector<8xf32>
    %23 = vector.shape_cast %22 : vector<8xf32> to vector<8x1xf32>
    %24 = arith.addf %21, %23 : vector<8x1xf32>
    %c0_9 = arith.constant 0 : index
    %c0_10 = arith.constant 0 : index
    %25 = vector.load %arg10[%c0_9, %c0_10] : memref<8x1xf32, #tpu.memory_space<vmem>>, vector<8x1xf32>
    tpu.vector_store %arg10[%c0_9, %c0_10], %24 {strides = array<i32>} : memref<8x1xf32, #tpu.memory_space<vmem>>, vector<8x1xf32>,
    %c0_11 = arith.constant 0 : index
    %c0_12 = arith.constant 0 : index
    %26 = vector.load %arg11[%c0_11, %c0_12] : memref<8x1xf32, #tpu.memory_space<vmem>>, vector<8x1xf32>
    %cst_13 = arith.constant dense<0.000000e+00> : vector<8xf32>
    %27 = vector.multi_reduction <add>, %20, %cst_13 [1] : vector<8x128xf32> to vector<8xf32>
    %28 = vector.shape_cast %27 : vector<8xf32> to vector<8x1xf32>
    %29 = arith.addf %26, %28 : vector<8x1xf32>
    %c0_14 = arith.constant 0 : index
    %c0_15 = arith.constant 0 : index
    %30 = vector.load %arg11[%c0_14, %c0_15] : memref<8x1xf32, #tpu.memory_space<vmem>>, vector<8x1xf32>
    tpu.vector_store %arg11[%c0_14, %c0_15], %29 {strides = array<i32>} : memref<8x1xf32, #tpu.memory_space<vmem>>, vector<8x1xf32>,
    %cst_16 = arith.constant 1.000000e+00 : bf16
    %31 = vector.broadcast %cst_16 : bf16 to vector<8x128xbf16>
    %32 = arith.truncf %20 : vector<8x128xf32> to vector<8x128xbf16>
    %33 = tpu.concatenate %4, %32, %31 in 0 : vector<8x128xbf16>, vector<8x128xbf16>, vector<8x128xbf16> -> vector<24x128xbf16>
    %c0_17 = arith.constant 0 : index
    %c0_18 = arith.constant 0 : index
    %34 = vector.load %arg9[%c0_17, %c0_18] : memref<24x128xf32, #tpu.memory_space<vmem>>, vector<24x128xf32>
    %c0_19 = arith.constant 0 : index
    %c0_20 = arith.constant 0 : index
    %c0_21 = arith.constant 0 : index
    %35 = vector.load %arg5[%c0_19, %c0_20, %c0_21] : memref<1x128x128xbf16, #tpu.memory_space<vmem>>, vector<1x128x128xbf16>
    %36 = vector.shape_cast %35 : vector<1x128x128xbf16> to vector<128x128xbf16>
    %cst_22 = arith.constant dense<0.000000e+00> : vector<24x128xf32>
    %37 = tpu.matmul %33, %36, %cst_22 {dimension_numbers = #tpu.dot_dimension_numbers<[1], [0], [0], [1], [0, 0, 1, 1], [], []>} : vector<24x128xbf16>, vector<128x128xbf16>, vector<24x128xf32> -> vector<24x128xf32>
    %38 = arith.addf %34, %37 : vector<24x128xf32>
    %c0_23 = arith.constant 0 : index
    %c0_24 = arith.constant 0 : index
    %39 = vector.load %arg9[%c0_23, %c0_24] : memref<24x128xf32, #tpu.memory_space<vmem>>, vector<24x128xf32>
    tpu.vector_store %arg9[%c0_23, %c0_24], %38 {strides = array<i32>} : memref<24x128xf32, #tpu.memory_space<vmem>>, vector<24x128xf32>,
    %c0_i32_25 = arith.constant 0 : i32
    %40 = arith.cmpi eq, %arg2, %c0_i32_25 : i32
    %41 = arith.extui %40 : i1 to i32
    %c0_i32_26 = arith.constant 0 : i32
    %42 = arith.cmpi ne, %41, %c0_i32_26 : i32
    scf.if %42 {
      %c0_27 = arith.constant 0 : index
      %43 = memref.load %arg3[%c0_27] : memref<4xf32, #tpu.memory_space<smem>>
      %c1 = arith.constant 1 : index
      %44 = memref.load %arg3[%c1] : memref<4xf32, #tpu.memory_space<smem>>
      %c2 = arith.constant 2 : index
      %45 = memref.load %arg3[%c2] : memref<4xf32, #tpu.memory_space<smem>>
      %c3 = arith.constant 3 : index
      %46 = memref.load %arg3[%c3] : memref<4xf32, #tpu.memory_space<smem>>
      %c0_28 = arith.constant 0 : index
      %c0_29 = arith.constant 0 : index
      %47 = vector.load %arg9[%c0_28, %c0_29] : memref<24x128xf32, #tpu.memory_space<vmem>>, vector<8x128xf32>
      %c8 = arith.constant 8 : index
      %c0_30 = arith.constant 0 : index
      %48 = vector.load %arg9[%c8, %c0_30] : memref<24x128xf32, #tpu.memory_space<vmem>>, vector<8x128xf32>
      %c16 = arith.constant 16 : index
      %c0_31 = arith.constant 0 : index
      %49 = vector.load %arg9[%c16, %c0_31] : memref<24x128xf32, #tpu.memory_space<vmem>>, vector<8x128xf32>
      %50 = vector.extract_strided_slice %49 {offsets = [0, 0], sizes = [1, 128], strides = [1, 1]} : vector<8x128xf32> to vector<1x128xf32>
      %c0_32 = arith.constant 0 : index
      %c0_33 = arith.constant 0 : index
      %51 = vector.load %arg10[%c0_32, %c0_33] : memref<8x1xf32, #tpu.memory_space<vmem>>, vector<8x1xf32>
      %52 = vector.broadcast %51 : vector<8x1xf32> to vector<8x128xf32>
      %53 = arith.subf %52, %47 : vector<8x128xf32>
      %c0_34 = arith.constant 0 : index
      %c0_35 = arith.constant 0 : index
      %54 = vector.load %arg11[%c0_34, %c0_35] : memref<8x1xf32, #tpu.memory_space<vmem>>, vector<8x1xf32>
      %55 = vector.broadcast %54 : vector<8x1xf32> to vector<8x128xf32>
      %56 = vector.broadcast %50 : vector<1x128xf32> to vector<8x128xf32>
      %57 = arith.addf %55, %56 : vector<8x128xf32>
      %cst_36 = arith.constant 1.000000e+00 : f32
      %58 = vector.broadcast %cst_36 : f32 to vector<8x128xf32>
      %59 = arith.addf %57, %58 : vector<8x128xf32>
      %cst_37 = arith.constant 2.000000e+00 : f32
      %60 = vector.broadcast %cst_37 : f32 to vector<8x128xf32>
      %61 = arith.mulf %60, %48 : vector<8x128xf32>
      %cst_38 = arith.constant 1.000000e+00 : f32
      %62 = vector.broadcast %cst_38 : f32 to vector<8x128xf32>
      %63 = arith.addf %61, %62 : vector<8x128xf32>
      %64 = tpu.reciprocal %59 {approx = true} : vector<8x128xf32> -> vector<8x128xf32>
      %65 = arith.mulf %63, %64 : vector<8x128xf32>
      %cst_39 = arith.constant 1.000000e+00 : f32
      %66 = vector.broadcast %cst_39 : f32 to vector<8x128xf32>
      %67 = arith.subf %66, %65 : vector<8x128xf32>
      %c0_40 = arith.constant 0 : index
      %c0_41 = arith.constant 0 : index
      %c0_42 = arith.constant 0 : index
      %68 = vector.load %arg6[%c0_40, %c0_41, %c0_42] : memref<1x8x8xf32, #tpu.memory_space<vmem>>, vector<1x8x8xf32>
      %69 = vector.shape_cast %68 : vector<1x8x8xf32> to vector<8x8xf32>
      %c0_43 = arith.constant 0 : index
      %c0_44 = arith.constant 0 : index
      %c0_45 = arith.constant 0 : index
      %70 = vector.load %arg7[%c0_43, %c0_44, %c0_45] : memref<1x8x128xf32, #tpu.memory_space<vmem>>, vector<1x8x128xf32>
      %71 = vector.shape_cast %70 : vector<1x8x128xf32> to vector<8x128xf32>
      %72 = vector.extract_strided_slice %69 {offsets = [0, 0], sizes = [8, 1], strides = [1, 1]} : vector<8x8xf32> to vector<8x1xf32>
      %73 = vector.extract_strided_slice %71 {offsets = [0, 0], sizes = [1, 128], strides = [1, 1]} : vector<8x128xf32> to vector<1x128xf32>
      %74 = vector.broadcast %72 : vector<8x1xf32> to vector<8x128xf32>
      %75 = vector.broadcast %73 : vector<1x128xf32> to vector<8x128xf32>
      %76 = arith.subf %74, %75 : vector<8x128xf32>
      %77 = math.absf %76 : vector<8x128xf32>
      %78 = vector.extract_strided_slice %69 {offsets = [0, 1], sizes = [8, 1], strides = [1, 1]} : vector<8x8xf32> to vector<8x1xf32>
      %79 = vector.extract_strided_slice %71 {offsets = [1, 0], sizes = [1, 128], strides = [1, 1]} : vector<8x128xf32> to vector<1x128xf32>
      %80 = vector.broadcast %78 : vector<8x1xf32> to vector<8x128xf32>
      %81 = vector.broadcast %79 : vector<1x128xf32> to vector<8x128xf32>
      %82 = arith.subf %80, %81 : vector<8x128xf32>
      %83 = math.absf %82 : vector<8x128xf32>
      %84 = arith.addf %77, %83 : vector<8x128xf32>
      %85 = vector.extract_strided_slice %69 {offsets = [0, 2], sizes = [8, 1], strides = [1, 1]} : vector<8x8xf32> to vector<8x1xf32>
      %86 = vector.extract_strided_slice %71 {offsets = [2, 0], sizes = [1, 128], strides = [1, 1]} : vector<8x128xf32> to vector<1x128xf32>
      %87 = vector.broadcast %85 : vector<8x1xf32> to vector<8x128xf32>
      %88 = vector.broadcast %86 : vector<1x128xf32> to vector<8x128xf32>
      %89 = arith.subf %87, %88 : vector<8x128xf32>
      %90 = math.absf %89 : vector<8x128xf32>
      %91 = arith.addf %84, %90 : vector<8x128xf32>
      %92 = vector.extract_strided_slice %69 {offsets = [0, 3], sizes = [8, 1], strides = [1, 1]} : vector<8x8xf32> to vector<8x1xf32>
      %93 = vector.extract_strided_slice %71 {offsets = [3, 0], sizes = [1, 128], strides = [1, 1]} : vector<8x128xf32> to vector<1x128xf32>
      %94 = vector.broadcast %92 : vector<8x1xf32> to vector<8x128xf32>
      %95 = vector.broadcast %93 : vector<1x128xf32> to vector<8x128xf32>
      %96 = arith.subf %94, %95 : vector<8x128xf32>
      %97 = math.absf %96 : vector<8x128xf32>
      %98 = arith.addf %91, %97 : vector<8x128xf32>
      %99 = vector.extract_strided_slice %69 {offsets = [0, 4], sizes = [8, 1], strides = [1, 1]} : vector<8x8xf32> to vector<8x1xf32>
      %100 = vector.extract_strided_slice %69 {offsets = [0, 5], sizes = [8, 1], strides = [1, 1]} : vector<8x8xf32> to vector<8x1xf32>
      %101 = vector.extract_strided_slice %69 {offsets = [0, 6], sizes = [8, 1], strides = [1, 1]} : vector<8x8xf32> to vector<8x1xf32>
      %102 = vector.extract_strided_slice %69 {offsets = [0, 7], sizes = [8, 1], strides = [1, 1]} : vector<8x8xf32> to vector<8x1xf32>
      %103 = vector.extract_strided_slice %71 {offsets = [4, 0], sizes = [1, 128], strides = [1, 1]} : vector<8x128xf32> to vector<1x128xf32>
      %104 = vector.extract_strided_slice %71 {offsets = [5, 0], sizes = [1, 128], strides = [1, 1]} : vector<8x128xf32> to vector<1x128xf32>
      %105 = vector.extract_strided_slice %71 {offsets = [6, 0], sizes = [1, 128], strides = [1, 1]} : vector<8x128xf32> to vector<1x128xf32>
      %106 = vector.extract_strided_slice %71 {offsets = [7, 0], sizes = [1, 128], strides = [1, 1]} : vector<8x128xf32> to vector<1x128xf32>
      %107 = arith.subf %101, %99 : vector<8x1xf32>
      %108 = arith.subf %102, %100 : vector<8x1xf32>
      %109 = arith.mulf %107, %108 : vector<8x1xf32>
      %110 = arith.subf %105, %103 : vector<1x128xf32>
      %111 = arith.subf %106, %104 : vector<1x128xf32>
      %112 = arith.mulf %110, %111 : vector<1x128xf32>
      %113 = vector.broadcast %101 : vector<8x1xf32> to vector<8x128xf32>
      %114 = vector.broadcast %105 : vector<1x128xf32> to vector<8x128xf32>
      %115 = arith.minimumf %113, %114 : vector<8x128xf32>
      %116 = vector.broadcast %99 : vector<8x1xf32> to vector<8x128xf32>
      %117 = vector.broadcast %103 : vector<1x128xf32> to vector<8x128xf32>
      %118 = arith.maximumf %116, %117 : vector<8x128xf32>
      %119 = arith.subf %115, %118 : vector<8x128xf32>
      %cst_46 = arith.constant 0.000000e+00 : f32
      %120 = vector.broadcast %cst_46 : f32 to vector<8x128xf32>
      %121 = arith.maximumf %119, %120 : vector<8x128xf32>
      %122 = vector.broadcast %102 : vector<8x1xf32> to vector<8x128xf32>
      %123 = vector.broadcast %106 : vector<1x128xf32> to vector<8x128xf32>
      %124 = arith.minimumf %122, %123 : vector<8x128xf32>
      %125 = vector.broadcast %100 : vector<8x1xf32> to vector<8x128xf32>
      %126 = vector.broadcast %104 : vector<1x128xf32> to vector<8x128xf32>
      %127 = arith.maximumf %125, %126 : vector<8x128xf32>
      %128 = arith.subf %124, %127 : vector<8x128xf32>
      %cst_47 = arith.constant 0.000000e+00 : f32
      %129 = vector.broadcast %cst_47 : f32 to vector<8x128xf32>
      %130 = arith.maximumf %128, %129 : vector<8x128xf32>
      %131 = arith.mulf %121, %130 : vector<8x128xf32>
      %132 = vector.broadcast %109 : vector<8x1xf32> to vector<8x128xf32>
      %133 = vector.broadcast %112 : vector<1x128xf32> to vector<8x128xf32>
      %134 = arith.addf %132, %133 : vector<8x128xf32>
      %135 = arith.subf %134, %131 : vector<8x128xf32>
      %136 = vector.broadcast %101 : vector<8x1xf32> to vector<8x128xf32>
      %137 = vector.broadcast %105 : vector<1x128xf32> to vector<8x128xf32>
      %138 = arith.maximumf %136, %137 : vector<8x128xf32>
      %139 = vector.broadcast %99 : vector<8x1xf32> to vector<8x128xf32>
      %140 = vector.broadcast %103 : vector<1x128xf32> to vector<8x128xf32>
      %141 = arith.minimumf %139, %140 : vector<8x128xf32>
      %142 = arith.subf %138, %141 : vector<8x128xf32>
      %cst_48 = arith.constant 0.000000e+00 : f32
      %143 = vector.broadcast %cst_48 : f32 to vector<8x128xf32>
      %144 = arith.maximumf %142, %143 : vector<8x128xf32>
      %145 = vector.broadcast %102 : vector<8x1xf32> to vector<8x128xf32>
      %146 = vector.broadcast %106 : vector<1x128xf32> to vector<8x128xf32>
      %147 = arith.maximumf %145, %146 : vector<8x128xf32>
      %148 = vector.broadcast %100 : vector<8x1xf32> to vector<8x128xf32>
      %149 = vector.broadcast %104 : vector<1x128xf32> to vector<8x128xf32>
      %150 = arith.minimumf %148, %149 : vector<8x128xf32>
      %151 = arith.subf %147, %150 : vector<8x128xf32>
      %cst_49 = arith.constant 0.000000e+00 : f32
      %152 = vector.broadcast %cst_49 : f32 to vector<8x128xf32>
      %153 = arith.maximumf %151, %152 : vector<8x128xf32>
      %154 = arith.mulf %144, %153 : vector<8x128xf32>
      %cst_50 = arith.constant 1.000000e-07 : f32
      %155 = vector.broadcast %cst_50 : f32 to vector<8x128xf32>
      %156 = arith.maximumf %135, %155 : vector<8x128xf32>
      %157 = tpu.reciprocal %156 {approx = true} : vector<8x128xf32> -> vector<8x128xf32>
      %cst_51 = arith.constant 1.000000e-07 : f32
      %158 = vector.broadcast %cst_51 : f32 to vector<8x128xf32>
      %159 = arith.maximumf %154, %158 : vector<8x128xf32>
      %160 = tpu.reciprocal %159 {approx = true} : vector<8x128xf32> -> vector<8x128xf32>
      %161 = arith.mulf %131, %157 : vector<8x128xf32>
      %162 = arith.subf %154, %135 : vector<8x128xf32>
      %163 = arith.mulf %162, %160 : vector<8x128xf32>
      %164 = arith.subf %161, %163 : vector<8x128xf32>
      %165 = vector.broadcast %43 : f32 to vector<8x128xf32>
      %166 = arith.mulf %165, %53 : vector<8x128xf32>
      %167 = vector.broadcast %44 : f32 to vector<8x128xf32>
      %168 = arith.mulf %167, %67 : vector<8x128xf32>
      %169 = arith.addf %166, %168 : vector<8x128xf32>
      %170 = vector.broadcast %45 : f32 to vector<8x128xf32>
      %171 = arith.mulf %170, %98 : vector<8x128xf32>
      %172 = arith.addf %169, %171 : vector<8x128xf32>
      %cst_52 = arith.constant 0.000000e+00 : f32
      %173 = vector.broadcast %cst_52 : f32 to vector<8x128xf32>
      %174 = arith.subf %173, %164 : vector<8x128xf32>
      %175 = vector.broadcast %46 : f32 to vector<8x128xf32>
      %176 = arith.mulf %175, %174 : vector<8x128xf32>
      %177 = arith.addf %172, %176 : vector<8x128xf32>
      %c0_53 = arith.constant 0 : index
      %c0_54 = arith.constant 0 : index
      %c0_55 = arith.constant 0 : index
      %178 = vector.load %arg8[%c0_53, %c0_54, %c0_55] : memref<1x8x128xf32, #tpu.memory_space<vmem>>, vector<1x8x128xf32>
      %179 = vector.shape_cast %178 : vector<1x8x128xf32> to vector<8x128xf32>
      %180 = vector.shape_cast %177 : vector<8x128xf32> to vector<1x8x128xf32>
      tpu.vector_store %arg8[%c0_53, %c0_54, %c0_55], %180 {strides = array<i32>} : memref<1x8x128xf32, #tpu.memory_space<vmem>>, vector<1x8x128xf32>,
    } else {
    }
    return
  }
  func.func @transform_0(%arg0: i32, %arg1: i32, %arg2: i32, %arg3: memref<4xf32, #tpu.memory_space<smem>>) -> (i32, i32, i32) {
    %c0_i32 = arith.constant 0 : i32
    %c0_i32_0 = arith.constant 0 : i32
    return %arg0, %c0_i32, %arg2 : i32, i32, i32
  }
  func.func @transform_1(%arg0: i32, %arg1: i32, %arg2: i32, %arg3: memref<4xf32, #tpu.memory_space<smem>>) -> (i32, i32, i32) {
    %c0_i32 = arith.constant 0 : i32
    return %arg0, %arg2, %arg1 : i32, i32, i32
  }
  func.func @transform_2(%arg0: i32, %arg1: i32, %arg2: i32, %arg3: memref<4xf32, #tpu.memory_space<smem>>) -> (i32, i32, i32) {
    %c0_i32 = arith.constant 0 : i32
    %c0_i32_0 = arith.constant 0 : i32
    %c0_i32_1 = arith.constant 0 : i32
    return %arg0, %c0_i32, %c0_i32_0 : i32, i32, i32
  }
  func.func @transform_3(%arg0: i32, %arg1: i32, %arg2: i32, %arg3: memref<4xf32, #tpu.memory_space<smem>>) -> (i32, i32, i32) {
    %c0_i32 = arith.constant 0 : i32
    %c0_i32_0 = arith.constant 0 : i32
    return %arg0, %c0_i32, %arg1 : i32, i32, i32
  }
  func.func @transform_4(%arg0: i32, %arg1: i32, %arg2: i32, %arg3: memref<4xf32, #tpu.memory_space<smem>>) -> (i32, i32, i32) {
    %c0_i32 = arith.constant 0 : i32
    %c0_i32_0 = arith.constant 0 : i32
    return %arg0, %c0_i32, %arg1 : i32, i32, i32
  }
}

</mosaic_0001>

<llo_original>
// kernel: _padded_cost.1
$region0: #{_padded_cost.1}
  #allocation0 [shape = 'u32[]', space=smem, size = 0x4, offset = 0x4, fixed_abs, tag = 'smem constant byte address 0x4 - core index']
  #allocation1 [shape = 'u32[72,128]{1,0:T(1,128)}', space=vmem, size = 0x9000, scoped, tag = 'internal scratch']
  #allocation2 [shape = 'f32[24,128]{1,0:T(8,128)}', space=vmem, size = 0x3000, scoped, tag = 'scratch operand']
  #allocation3 [shape = 'f32[8,1]{1,0:T(8,128)}', space=vmem, size = 0x1000, scoped, tag = 'scratch operand']
  #allocation4 [shape = 'f32[8,1]{1,0:T(8,128)}', space=vmem, size = 0x1000, scoped, tag = 'scratch operand']
  #allocation5 [shape = 's32[1]{0}', space=sflag, size = 0x4, scoped, tag = 'scoped memory for _padded_cost.1']
  #allocation6 [shape = 'u8[512]{0}', space=smem, size = 0x200, scoped, tag = 'prefetched SMEM operand 0']
  %s0 = inlined_call_operand.hbm [shape: f32[4], index: 0, kind: input, shape index: {}]
  %s1 = inlined_call_operand.hbm [shape: bf16[2,8,128], index: 1, kind: input, shape index: {}]
  %s2 = inlined_call_operand.hbm [shape: bf16[2,128,128], index: 2, kind: input, shape index: {}]
  %s3 = inlined_call_operand.hbm [shape: f32[2,8,8], index: 3, kind: input, shape index: {}]
  %s4 = inlined_call_operand.hbm [shape: f32[2,8,128], index: 4, kind: input, shape index: {}]
  %s5 = inlined_call_operand.hbm [shape: f32[2,8,128], index: 5, kind: output, shape index: {}]
  %s6 = sld [smem:[#allocation0]]
  $region73: #{_padded_cost.1} parent=0
    _
  %s8 = ssub.s32 1, %s6
  %s9 = scalar_select 0, %s8, %s6
  %s11 = sshll.u32 %s0, 4
  %s12 = int_to_ptr.hbm [resolvable:$true] %s11
  %14 = dma.hbm_to_smem %s12, 16, [#allocation6], [#allocation5]
  %16 = dma.done [#allocation5], 16
  %17 = sfence
  $region1: #{_padded_cost.1} parent=0
    #allocation7 [shape = 'u8[4096]{0}', space=vmem, size = 0x1000, scoped, tag = 'input window, operand 1']
    #allocation8 [shape = 's32[2]{0}', space=sflag, size = 0x8, scoped, tag = 'scoped memory for _padded_cost.1']
    #allocation9 [shape = 's32[2]{0}', space=sflag, size = 0x8, scoped, tag = 'scoped memory for _padded_cost.1']
    #allocation10 [shape = 'u8[65536]{0}', space=vmem, size = 0x10000, scoped, tag = 'input window, operand 2']
    #allocation11 [shape = 's32[2]{0}', space=sflag, size = 0x8, scoped, tag = 'scoped memory for _padded_cost.1']
    #allocation12 [shape = 'u8[8192]{0}', space=vmem, size = 0x2000, scoped, tag = 'input window, operand 3']
    #allocation13 [shape = 'u8[8192]{0}', space=vmem, size = 0x2000, scoped, tag = 'input window, operand 4']
    #allocation14 [shape = 's32[2]{0}', space=sflag, size = 0x8, scoped, tag = 'scoped memory for _padded_cost.1']
    #allocation15 [shape = 'u8[8192]{0}', space=vmem, size = 0x2000, scoped, tag = 'output window, operand 0']
    %18 = vsyncpa [#allocation8], 0
    %s19 = scalar_lea.sflag [#allocation8], 1
    %20 = vsyncpa %s19, 0
    %21 = vsyncpa [#allocation11], 0
    %s22 = scalar_lea.sflag [#allocation11], 1
    %23 = vsyncpa %s22, 0
    %24 = vsyncpa [#allocation14], 0
    %s25 = scalar_lea.sflag [#allocation14], 1
    %26 = vsyncpa %s25, 0
    %27 = vsyncpa [#allocation9], 0
    %s28 = scalar_lea.sflag [#allocation9], 1
    %29 = vsyncpa %s28, 0
    loop: start=0, step=1, limit=4
    $region2: #{_padded_cost.1} parent=1 // loop_pre_header
      _
    $region3: #{_padded_cost.1} parent=1 // loop_header
      %s31 = sphi 0, %s35
      %p32 = scmp.ge.s32.totalorder %s31, 4
      %s38 = sphi 0, %s57
      %s39 = sphi 0, %s53
      %s40 = sphi 0, %s49
      %s41 = sphi 0, %s38
      %s42 = sphi 0, %s39
      %s43 = sphi 0, %s40
      %s44 = sphi 0, %s41
      %s45 = sphi 0, %s42
      %s46 = sphi 0, %s43
      %s62 = sphi 0, %s64
      %s65 = sphi 0, %s62
      %s66 = sphi 0, %s65
      %s82 = sphi 0, %s66
      %s92 = sphi 0, %s94
      %s95 = sphi 0, %s92
      %s96 = sphi 0, %s95
      %s112 = sphi 0, %s96
      %s118 = sphi 0, %s120
      %s121 = sphi 0, %s118
      %s122 = sphi 0, %s121
      %s138 = sphi 0, %s122
      %s146 = sphi 0, %s148
      %s149 = sphi 0, %s146
      %s150 = sphi 0, %s149
      %s166 = sphi 0, %s150
      %s174 = sphi 0, %s176
      %s177 = sphi 0, %s174
      %s178 = sphi 0, %s177
      %s194 = sphi 0, %s178
    $region4: #{_padded_cost.1} parent=1 // loop_header_branch
      %34 = sbr.rel (%p32) target = $region8
    $region5: #{_padded_cost.1} parent=1 // loop_body
      %s36 = ssub.s32 %s31, 1
      %s37 = ssub.s32 %s31, 2
      %s47 = sadd.s32 1, %s40
      %p48 = scmp.ge.s32.totalorder %s47, 1
      %s49 = scalar_select %p48, 0, %s47
      %s50 = sadd.s32 1, %s39
      %s51 = scalar_select %p48, %s50, %s39
      %p52 = scmp.ge.s32.totalorder %s51, 1
      %s53 = scalar_select %p52, 0, %s51
      %s54 = sadd.s32 1, %s38
      %s55 = scalar_select %p52, %s54, %s38
      %p56 = scmp.ge.s32.totalorder %s55, 2
      %s57 = scalar_select %p56, 0, %s55
      %s58 = ssub.s32 %s38, %s57
      %s59 = ssub.s32 %s40, %s49
      %s60 = sor.u32 %s58, %s59
      %p61 = scmp.eq.s32.totalorder %s60, 0
      %s63 = sadd.s32 %s62, 1
      %s64 = scalar_select %p61, %s62, %s63
      %p67 = pneg %p61
      %p68 = scmp.eq.s32.totalorder %s31, 1
      %p69 = por %p67, %p68
      %p70 = scmp.ne.s32.totalorder %s62, %s65
      %p71 = scmp.eq.s32.totalorder %s31, 0
      %p72 = por %p70, %p71
      %p73 = scmp.ne.s32.totalorder %s62, %s65
      %p74 = scmp.eq.s32.totalorder %s36, 1
      %p75 = por %p73, %p74
      %p76 = scmp.ne.s32.totalorder %s65, %s66
      %p77 = scmp.eq.s32.totalorder %s36, 0
      %p78 = por %p76, %p77
      %p79 = scmp.ne.s32.totalorder %s65, %s66
      %p80 = scmp.eq.s32.totalorder %s37, 1
      %p81 = por %p79, %p80
      %p83 = scmp.ne.s32.totalorder %s66, %s82
      %p84 = scmp.eq.s32.totalorder %s37, 0
      %p85 = por %p83, %p84
      %s86 = ssub.s32 %s38, %s57
      %s87 = ssub.s32 %s40, %s49
      %s88 = sor.u32 %s86, %s87
      %s89 = ssub.s32 %s39, %s53
      %s90 = sor.u32 %s88, %s89
      %p91 = scmp.eq.s32.totalorder %s90, 0
      %s93 = sadd.s32 %s92, 1
      %s94 = scalar_select %p91, %s92, %s93
      %p97 = pneg %p91
      %p98 = scmp.eq.s32.totalorder %s31, 1
      %p99 = por %p97, %p98
      %p100 = scmp.ne.s32.totalorder %s92, %s95
      %p101 = scmp.eq.s32.totalorder %s31, 0
      %p102 = por %p100, %p101
      %p103 = scmp.ne.s32.totalorder %s92, %s95
      %p104 = scmp.eq.s32.totalorder %s36, 1
      %p105 = por %p103, %p104
      %p106 = scmp.ne.s32.totalorder %s95, %s96
      %p107 = scmp.eq.s32.totalorder %s36, 0
      %p108 = por %p106, %p107
      %p109 = scmp.ne.s32.totalorder %s95, %s96
      %p110 = scmp.eq.s32.totalorder %s37, 1
      %p111 = por %p109, %p110
      %p113 = scmp.ne.s32.totalorder %s96, %s112
      %p114 = scmp.eq.s32.totalorder %s37, 0
      %p115 = por %p113, %p114
      %s116 = ssub.s32 %s38, %s57
      %p117 = scmp.eq.s32.totalorder %s116, 0
      %s119 = sadd.s32 %s118, 1
      %s120 = scalar_select %p117, %s118, %s119
      %p123 = pneg %p117
      %p124 = scmp.eq.s32.totalorder %s31, 1
      %p125 = por %p123, %p124
      %p126 = scmp.ne.s32.totalorder %s118, %s121
      %p127 = scmp.eq.s32.totalorder %s31, 0
      %p128 = por %p126, %p127
      %p129 = scmp.ne.s32.totalorder %s118, %s121
      %p130 = scmp.eq.s32.totalorder %s36, 1
      %p131 = por %p129, %p130
      %p132 = scmp.ne.s32.totalorder %s121, %s122
      %p133 = scmp.eq.s32.totalorder %s36, 0
      %p134 = por %p132, %p133
      %p135 = scmp.ne.s32.totalorder %s121, %s122
      %p136 = scmp.eq.s32.totalorder %s37, 1
      %p137 = por %p135, %p136
      %p139 = scmp.ne.s32.totalorder %s122, %s138
      %p140 = scmp.eq.s32.totalorder %s37, 0
      %p141 = por %p139, %p140
      %s142 = ssub.s32 %s38, %s57
      %s143 = ssub.s32 %s39, %s53
      %s144 = sor.u32 %s142, %s143
      %p145 = scmp.eq.s32.totalorder %s144, 0
      %s147 = sadd.s32 %s146, 1
      %s148 = scalar_select %p145, %s146, %s147
      %p151 = pneg %p145
      %p152 = scmp.eq.s32.totalorder %s31, 1
      %p153 = por %p151, %p152
      %p154 = scmp.ne.s32.totalorder %s146, %s149
      %p155 = scmp.eq.s32.totalorder %s31, 0
      %p156 = por %p154, %p155
      %p157 = scmp.ne.s32.totalorder %s146, %s149
      %p158 = scmp.eq.s32.totalorder %s36, 1
      %p159 = por %p157, %p158
      %p160 = scmp.ne.s32.totalorder %s149, %s150
      %p161 = scmp.eq.s32.totalorder %s36, 0
      %p162 = por %p160, %p161
      %p163 = scmp.ne.s32.totalorder %s149, %s150
      %p164 = scmp.eq.s32.totalorder %s37, 1
      %p165 = por %p163, %p164
      %p167 = scmp.ne.s32.totalorder %s150, %s166
      %p168 = scmp.eq.s32.totalorder %s37, 0
      %p169 = por %p167, %p168
      %s170 = ssub.s32 %s38, %s57
      %s171 = ssub.s32 %s39, %s53
      %s172 = sor.u32 %s170, %s171
      %p173 = scmp.eq.s32.totalorder %s172, 0
      %s175 = sadd.s32 %s174, 1
      %s176 = scalar_select %p173, %s174, %s175
      %p179 = pneg %p173
      %p180 = scmp.eq.s32.totalorder %s31, 1
      %p181 = por %p179, %p180
      %p182 = scmp.ne.s32.totalorder %s174, %s177
      %p183 = scmp.eq.s32.totalorder %s31, 0
      %p184 = por %p182, %p183
      %p185 = scmp.ne.s32.totalorder %s174, %s177
      %p186 = scmp.eq.s32.totalorder %s36, 1
      %p187 = por %p185, %p186
      %p188 = scmp.ne.s32.totalorder %s177, %s178
      %p189 = scmp.eq.s32.totalorder %s36, 0
      %p190 = por %p188, %p189
      %p191 = scmp.ne.s32.totalorder %s177, %s178
      %p192 = scmp.eq.s32.totalorder %s37, 1
      %p193 = por %p191, %p192
      %p195 = scmp.ne.s32.totalorder %s178, %s194
      %p196 = scmp.eq.s32.totalorder %s37, 0
      %p197 = por %p195, %p196
      %p198 = scmp.le.s32.totalorder 1, %s31
      %p199 = scmp.lt.s32.totalorder %s31, 3
      %p200 = pnand %p198, %p199
      %p201 = pneg %p200
      // Predicated region
      $region9: #{_padded_cost.1} parent=5 // pred_check
        _
      $region10: #{_padded_cost.1} parent=5 // pred_check_branch
        %203 = sbr.rel (%p200) target = $region12
      $region11: #{_padded_cost.1} parent=5 // pred_region
        %s204 = ssub.s32 %s31, 1
      $region12: #{_padded_cost.1} parent=5 // pred_fallthru
        _
      %p205 = scmp.lt.s32.totalorder %s31, 2
      // Predicated region
      $region13: #{_padded_cost.1} parent=5 // pred_check
        %p206 = pneg %p205
      $region14: #{_padded_cost.1} parent=5 // pred_check_branch
        %208 = sbr.rel (%p206) target = $region16
      $region15: #{_padded_cost.1} parent=5 // pred_region
        // Predicated region
        $region17: #{_padded_cost.1} parent=15 // pred_check
          %p209 = pneg %p72
        $region18: #{_padded_cost.1} parent=15 // pred_check_branch
          %211 = sbr.rel (%p209) target = $region20
        $region19: #{_padded_cost.1} parent=15 // pred_region
          %s212 = sand.u32 %s62, 1
          %s213 = scalar_lea.sflag [#allocation8], %s212
          %s214 = sand.u32 %s62, 1
          %s215 = smul.addr %s214, 4
          %s216 = scalar_lea.vmem [#allocation7], %s215
          %218 = vsyncadd %s213, 0
          %s219 = sadd.s32 %s40, %s38
          %s220 = smul.addr %s219, 4
          %s221 = scalar_lea.hbm %s1, %s220
          %s223 = sshll.u32 %s221, 4
          %s224 = int_to_ptr.hbm [resolvable:$true] %s223
          %s225 = sshll.u32 %s216, 4
          %s226 = int_to_ptr.vmem [resolvable:$true] %s225
          %228 = dma.hbm_to_vmem [thread:$0]  %s224, 64, %s226, %s213
        $region20: #{_padded_cost.1} parent=15 // pred_fallthru
          _
        // Predicated region
        $region21: #{_padded_cost.1} parent=15 // pred_check
          %p229 = pneg %p102
        $region22: #{_padded_cost.1} parent=15 // pred_check_branch
          %231 = sbr.rel (%p229) target = $region24
        $region23: #{_padded_cost.1} parent=15 // pred_region
          %s232 = sand.u32 %s31, 1
          %s233 = scalar_lea.sflag [#allocation11], %s232
          %s234 = sand.u32 %s92, 1
          %s235 = smul.addr %s234, 64
          %s236 = scalar_lea.vmem [#allocation10], %s235
          %s237 = smul.u32 16, %s40
          %239 = vsyncadd %s233, 0
          %s240 = sadd.s32 %s39, %s237
          %s241 = smul.addr %s38, 16
          %s242 = sadd.s32 %s240, %s241
          %s243 = smul.addr %s242, 4
          %s244 = scalar_lea.hbm %s2, %s243
          %s245 = sshll.u32 %s244, 4
          %s246 = int_to_ptr.hbm [resolvable:$true] %s245
          %s247 = sshll.u32 %s236, 4
          %s248 = int_to_ptr.vmem [resolvable:$true] %s247
          %253 = dma.hbm_to_vmem [thread:$0]  %s246, 1024, %s248, %s233, 64, 64, 4
        $region24: #{_padded_cost.1} parent=15 // pred_fallthru
          _
        // Predicated region
        $region25: #{_padded_cost.1} parent=15 // pred_check
          %p254 = pneg %p128
        $region26: #{_padded_cost.1} parent=15 // pred_check_branch
          %256 = sbr.rel (%p254) target = $region28
        $region27: #{_padded_cost.1} parent=15 // pred_region
          %s257 = sand.u32 %s31, 1
          %s258 = scalar_lea.sflag [#allocation11], %s257
          %s259 = sand.u32 %s118, 1
          %s260 = smul.addr %s259, 8
          %s261 = scalar_lea.vmem [#allocation12], %s260
          %263 = vsyncadd %s258, 0
          %s264 = smul.addr %s38, 8
          %s265 = scalar_lea.hbm %s3, %s264
          %s267 = sshll.u32 %s265, 4
          %s268 = int_to_ptr.hbm [resolvable:$true] %s267
          %s269 = sshll.u32 %s261, 4
          %s270 = int_to_ptr.vmem [resolvable:$true] %s269
          %272 = dma.hbm_to_vmem [thread:$0]  %s268, 128, %s270, %s258
        $region28: #{_padded_cost.1} parent=15 // pred_fallthru
          _
        // Predicated region
        $region29: #{_padded_cost.1} parent=15 // pred_check
          %p273 = pneg %p156
        $region30: #{_padded_cost.1} parent=15 // pred_check_branch
          %275 = sbr.rel (%p273) target = $region32
        $region31: #{_padded_cost.1} parent=15 // pred_region
          %s276 = sand.u32 %s146, 1
          %s277 = scalar_lea.sflag [#allocation14], %s276
          %s278 = sand.u32 %s146, 1
          %s279 = smul.addr %s278, 8
          %s280 = scalar_lea.vmem [#allocation13], %s279
          %282 = vsyncadd %s277, 0
          %s283 = sadd.s32 %s39, %s38
          %s284 = smul.addr %s283, 8
          %s285 = scalar_lea.hbm %s4, %s284
          %s287 = sshll.u32 %s285, 4
          %s288 = int_to_ptr.hbm [resolvable:$true] %s287
          %s289 = sshll.u32 %s280, 4
          %s290 = int_to_ptr.vmem [resolvable:$true] %s289
          %292 = dma.hbm_to_vmem [thread:$0]  %s288, 128, %s290, %s277
        $region32: #{_padded_cost.1} parent=15 // pred_fallthru
          _
      $region16: #{_padded_cost.1} parent=5 // pred_fallthru
        _
      %p293 = scmp.le.s32.totalorder 1, %s31
      %p294 = scmp.lt.s32.totalorder %s31, 3
      %p295 = pnand %p293, %p294
      %p296 = pneg %p295
      // Predicated region
      $region33: #{_padded_cost.1} parent=5 // pred_check
        _
      $region34: #{_padded_cost.1} parent=5 // pred_check_branch
        %298 = sbr.rel (%p295) target = $region36
      $region35: #{_padded_cost.1} parent=5 // pred_region
        %s299 = ssub.s32 %s31, 1
        %s300 = sand.u32 %s65, 1
        %s301 = scalar_lea.sflag [#allocation8], %s300
        %s302 = sand.u32 %s65, 1
        %s303 = smul.addr %s302, 4
        %s304 = scalar_lea.vmem [#allocation7], %s303
        // Predicated region
        $region37: #{_padded_cost.1} parent=35 // pred_check
          %p305 = pneg %p78
        $region38: #{_padded_cost.1} parent=35 // pred_check_branch
          %307 = sbr.rel (%p305) target = $region40
        $region39: #{_padded_cost.1} parent=35 // pred_region
          %309 = dma.done %s301, 64
        $region40: #{_padded_cost.1} parent=35 // pred_fallthru
          _
        %s310 = sand.u32 %s36, 1
        %s311 = scalar_lea.sflag [#allocation11], %s310
        %s312 = sand.u32 %s95, 1
        %s313 = smul.addr %s312, 64
        %s314 = scalar_lea.vmem [#allocation10], %s313
        // Predicated region
        $region41: #{_padded_cost.1} parent=35 // pred_check
          %p315 = pneg %p108
        $region42: #{_padded_cost.1} parent=35 // pred_check_branch
          %317 = sbr.rel (%p315) target = $region44
        $region43: #{_padded_cost.1} parent=35 // pred_region
          %319 = dma.done %s311, 1024
        $region44: #{_padded_cost.1} parent=35 // pred_fallthru
          _
        %s320 = sand.u32 %s36, 1
        %s321 = scalar_lea.sflag [#allocation11], %s320
        %s322 = sand.u32 %s121, 1
        %s323 = smul.addr %s322, 8
        %s324 = scalar_lea.vmem [#allocation12], %s323
        // Predicated region
        $region45: #{_padded_cost.1} parent=35 // pred_check
          %p325 = pneg %p134
        $region46: #{_padded_cost.1} parent=35 // pred_check_branch
          %327 = sbr.rel (%p325) target = $region48
        $region47: #{_padded_cost.1} parent=35 // pred_region
          %329 = dma.done %s321, 128
        $region48: #{_padded_cost.1} parent=35 // pred_fallthru
          _
        %s330 = sand.u32 %s149, 1
        %s331 = scalar_lea.sflag [#allocation14], %s330
        %s332 = sand.u32 %s149, 1
        %s333 = smul.addr %s332, 8
        %s334 = scalar_lea.vmem [#allocation13], %s333
        // Predicated region
        $region49: #{_padded_cost.1} parent=35 // pred_check
          %p335 = pneg %p162
        $region50: #{_padded_cost.1} parent=35 // pred_check_branch
          %337 = sbr.rel (%p335) target = $region52
        $region51: #{_padded_cost.1} parent=35 // pred_region
          %339 = dma.done %s331, 128
        $region52: #{_padded_cost.1} parent=35 // pred_fallthru
          _
        %s340 = sand.u32 %s65, 1
        %s341 = scalar_lea.sflag [#allocation8], %s340
        %s342 = sand.u32 %s65, 1
        %s343 = smul.addr %s342, 4
        %s344 = scalar_lea.vmem [#allocation7], %s343
        %p345 = pneg %p78
        %p346 = pneg %p75
        %s347 = sand.u32 %s36, 1
        %s348 = scalar_lea.sflag [#allocation11], %s347
        %s349 = sand.u32 %s95, 1
        %s350 = smul.addr %s349, 64
        %s351 = scalar_lea.vmem [#allocation10], %s350
        %p352 = pneg %p108
        %p353 = pneg %p105
        %s354 = sand.u32 %s36, 1
        %s355 = scalar_lea.sflag [#allocation11], %s354
        %s356 = sand.u32 %s121, 1
        %s357 = smul.addr %s356, 8
        %s358 = scalar_lea.vmem [#allocation12], %s357
        %p359 = pneg %p134
        %p360 = pneg %p131
        %s361 = sand.u32 %s149, 1
        %s362 = scalar_lea.sflag [#allocation14], %s361
        %s363 = sand.u32 %s149, 1
        %s364 = smul.addr %s363, 8
        %s365 = scalar_lea.vmem [#allocation13], %s364
        %p366 = pneg %p162
        %p367 = pneg %p159
        %p368 = pneg %p190
        %p369 = pneg %p187
        %s370 = sand.u32 %s177, 1
        %s371 = scalar_lea.sflag [#allocation9], %s370
        %s372 = sand.u32 %s177, 1
        %s373 = smul.addr %s372, 8
        %s374 = scalar_lea.vmem [#allocation15], %s373
        %s375 = smul.u32 16, %s43
        %p377 = scmp.eq.s32.totalorder %s43, 0
        // Predicated region
        $region53: #{_padded_cost.1} parent=35 // pred_check
          %p378 = pneg %p377
        $region54: #{_padded_cost.1} parent=35 // pred_check_branch
          %380 = sbr.rel (%p378) target = $region56
        $region55: #{_padded_cost.1} parent=35 // pred_region
          %381 = vst [vmem:[#allocation2] sm:$0xff] 0.0
          %382 = vst [vmem:[#allocation2 + $0x8] sm:$0xff] 0.0
          %383 = vst [vmem:[#allocation2 + $0x10] sm:$0xff] 0.0
          %vm384 = vcmask 7168
          %385 = vst.msk [vmem:[#allocation3] sm:$0xff] %vm384, 0.0
          %386 = vst.msk [vmem:[#allocation4] sm:$0xff] %vm384, 0.0
        $region56: #{_padded_cost.1} parent=35 // pred_fallthru
          _
        %v387 = vld [vmem:[%s304] sm:$0xf]
        %v388 = vunpack.c.l.bf16 %v387
        %v389 = vand.u32 2147483647, %v388
        %v390 = vsub.f32 0.0, %v389
        %v391 = vmul.f32 %v390, 1.442695
        %v392 = vpow.pop %v391
        %v393 = vmax.f32 %v388, 0.0
        %v394 = vadd.f32 %v392, 1.0
        %v395 = vlog2.pop %v394
        %v396 = vmul.f32 %v395, 0.6931472
        %v397 = vmul.f32 -0.5, %v392
        %v398 = vadd.f32 %v397, 1.0
        %v399 = vmul.f32 %v398, %v392
        %v400 = vand.u32 2147483647, %v392
        %vm401 = vcmp.lt.f32.partialorder %v400, 0.0004427343
        %v402 = vsel %vm401, %v399, %v396
        %v403 = vadd.f32 %v393, %v402
        %v404 = vadd.f32 %v392, 1.0
        %v405 = vrcp.pop %v404
        %vm406 = vcmp.ge.f32.partialorder %v388, 0.0
        %v407 = vmul.f32 %v392, %v405
        %v408 = vsel %vm406, %v405, %v407
        %v409 = vld [vmem:[#allocation3] sm:$0xff]
        %410 = vadd.xlane.f32.xlu0 %v403
        %v411 = vpop.xlane.xlu0 %410
        %v412 = vadd.f32 %v409, %v411
        %vm413 = vcmask 7168
        %414 = vst.msk [vmem:[#allocation3] sm:$0xff] %vm413, %v412
        %v415 = vld [vmem:[#allocation4] sm:$0xff]
        %416 = vadd.xlane.f32.xlu0 %v408
        %v417 = vpop.xlane.xlu0 %416
        %v418 = vadd.f32 %v415, %v417
        %419 = vst.msk [vmem:[#allocation4] sm:$0xff] %vm413, %v418
        %v420 = vpack.c.bf16 %v408, %v408
        %v422 = vunpack.c.l.b16 %v420
        %v423 = vpack.c.b16 %v422, %v422
        %vm424 = vcmask 1043456
        %v427 = vsel %vm424, %v387, %v423
        %v429 = vld [vmem:[#allocation2] sm:$0xff]
        %v430 = vld [vmem:[#allocation2 + $0x8] sm:$0xff]
        %v431 = vld [vmem:[#allocation2 + $0x10] sm:$0xff]
        %v432 = vld [vmem:[%s314] sm:$0xf]
        %v433 = vld [vmem:[%s314 + $0x4] sm:$0xf]
        %v434 = vld [vmem:[%s314 + $0x8] sm:$0xf]
        %v435 = vld [vmem:[%s314 + $0xc] sm:$0xf]
        %v436 = vld [vmem:[%s314 + $0x10] sm:$0xf]
        %v437 = vld [vmem:[%s314 + $0x14] sm:$0xf]
        %v438 = vld [vmem:[%s314 + $0x18] sm:$0xf]
        %v439 = vld [vmem:[%s314 + $0x1c] sm:$0xf]
        %v440 = vld [vmem:[%s314 + $0x20] sm:$0xf]
        %v441 = vld [vmem:[%s314 + $0x24] sm:$0xf]
        %v442 = vld [vmem:[%s314 + $0x28] sm:$0xf]
        %v443 = vld [vmem:[%s314 + $0x2c] sm:$0xf]
        %v444 = vld [vmem:[%s314 + $0x30] sm:$0xf]
        %v445 = vld [vmem:[%s314 + $0x34] sm:$0xf]
        %v446 = vld [vmem:[%s314 + $0x38] sm:$0xf]
        %v447 = vld [vmem:[%s314 + $0x3c] sm:$0xf]
        %v464 = vunpack.c.l.b16 %v432
        %v465 = vunpack.c.l.b16 %v433
        %v466 = vunpack.c.l.b16 %v434
        %v467 = vunpack.c.l.b16 %v435
        %v468 = vunpack.c.l.b16 %v436
        %v469 = vunpack.c.l.b16 %v437
        %v470 = vunpack.c.l.b16 %v438
        %v471 = vunpack.c.l.b16 %v439
        %v472 = vunpack.c.l.b16 %v440
        %v473 = vunpack.c.l.b16 %v441
        %v474 = vunpack.c.l.b16 %v442
        %v475 = vunpack.c.l.b16 %v443
        %v476 = vunpack.c.l.b16 %v444
        %v477 = vunpack.c.l.b16 %v445
        %v478 = vunpack.c.l.b16 %v446
        %v479 = vunpack.c.l.b16 %v447
        %v480 = vpack.c.b16 %v465, %v464
        %v481 = vpack.c.b16 %v467, %v466
        %v482 = vpack.c.b16 %v469, %v468
        %v483 = vpack.c.b16 %v471, %v470
        %v484 = vpack.c.b16 %v473, %v472
        %v485 = vpack.c.b16 %v475, %v474
        %v486 = vpack.c.b16 %v477, %v476
        %v487 = vpack.c.b16 %v479, %v478
        %496 = vmatpush.bf16.msra.mxu0 %v487
        %497 = vmatpush.bf16.msra.mxu0 %v486
        %498 = vmatpush.bf16.msra.mxu0 %v485
        %499 = vmatpush.bf16.msra.mxu0 %v484
        %500 = vmatpush.bf16.msra.mxu0 %v483
        %501 = vmatpush.bf16.msra.mxu0 %v482
        %502 = vmatpush.bf16.msra.mxu0 %v481
        %503 = vmatpush.bf16.msra.mxu0 %v480
        %504 = vmatmul.bf16.gmra.mxu0 %v427
        %v505 = vpop.f32.mrf.mxu0
        %v506 = vadd.f32 0.0, %v505
        %v507 = vpop.f32.mrf.mxu0
        %v508 = vadd.f32 0.0, %v507
        %509 = vmatmul.bf16.gmra.mxu0 1065369472
        %v510 = vpop.f32.mrf.mxu0
        %v511 = vadd.f32 0.0, %v510
        %v512 = vpop.f32.mrf.mxu0
        %513 = vdwg.mxu0
        %v514 = vadd.f32 %v429, %v506
        %v515 = vadd.f32 %v430, %v508
        %v516 = vadd.f32 %v431, %v511
        %517 = vst [vmem:[#allocation2] sm:$0xff] %v514
        %518 = vst [vmem:[#allocation2 + $0x8] sm:$0xff] %v515
        %519 = vst [vmem:[#allocation2 + $0x10] sm:$0xff] %v516
        // Predicated region
        $region57: #{_padded_cost.1} parent=35 // pred_check
          %p520 = pneg %p377
        $region58: #{_padded_cost.1} parent=35 // pred_check_branch
          %522 = sbr.rel (%p520) target = $region60
        $region59: #{_padded_cost.1} parent=35 // pred_region
          %s523 = sld [smem:[#allocation6]]
          %s524 = sld [smem:[#allocation6 + $0x1]]
          %s525 = sld [smem:[#allocation6 + $0x2]]
          %s526 = sld [smem:[#allocation6 + $0x3]]
          %v527 = vld [vmem:[#allocation2] sm:$0xff]
          %v528 = vld [vmem:[#allocation2 + $0x8] sm:$0xff]
          %v529 = vld [vmem:[#allocation2 + $0x10] sm:$0xff]
          %v530 = vld [vmem:[#allocation3] sm:$0xff]
          %532 = vset.pattern.permute.xlu0 0
          %533 = vperm.xlu0 %532, %v530
          %v534 = vpop.permute.xlu0 %533
          %v536 = vsub.f32 %v534, %v527
          %v537 = vld [vmem:[#allocation4] sm:$0xff]
          %539 = vset.pattern.permute.xlu0 0
          %540 = vperm.xlu0 %539, %v537
          %v541 = vpop.permute.xlu0 %540
          %v543 = vperm.slane %v529, 0
          %v544 = vadd.f32 %v541, %v543
          %v545 = vadd.f32 %v544, 1.0
          %v546 = vmul.f32 %v528, 2.0
          %v547 = vadd.f32 %v546, 1.0
          %v548 = vrcp.pop %v545
          %v549 = vmul.f32 %v547, %v548
          %v550 = vsub.f32 1.0, %v549
          %v551 = vld [vmem:[%s324] sm:$0xff]
          %v552 = vld [vmem:[%s334] sm:$0xff]
          %554 = vset.pattern.permute.xlu0 0
          %555 = vperm.xlu0 %554, %v551
          %v556 = vpop.permute.xlu0 %555
          %v558 = vperm.slane %v552, 0
          %v559 = vsub.f32 %v556, %v558
          %v560 = vand.u32 2147483647, %v559
          %561 = vset.pattern.permute.xlu0 1
          %562 = vperm.xlu0 %561, %v551
          %v563 = vpop.permute.xlu0 %562
          %v565 = vperm.slane %v552, 1
          %v566 = vsub.f32 %v563, %v565
          %v567 = vand.u32 2147483647, %v566
          %v568 = vadd.f32 %v560, %v567
          %569 = vset.pattern.permute.xlu0 2
          %570 = vperm.xlu0 %569, %v551
          %v571 = vpop.permute.xlu0 %570
          %v573 = vperm.slane %v552, 2
          %v574 = vsub.f32 %v571, %v573
          %v575 = vand.u32 2147483647, %v574
          %v576 = vadd.f32 %v568, %v575
          %577 = vset.pattern.permute.xlu0 3
          %578 = vperm.xlu0 %577, %v551
          %v579 = vpop.permute.xlu0 %578
          %v581 = vperm.slane %v552, 3
          %v582 = vsub.f32 %v579, %v581
          %v583 = vand.u32 2147483647, %v582
          %v584 = vadd.f32 %v576, %v583
          %585 = vrot.lane.b32.xlu0 %v551, 2
          %v586 = vpop.permute.xlu0 %585
          %v588 = vsub.f32 %v551, %v586
          %590 = vrot.lane.b32.xlu0 %v588, 127
          %v591 = vpop.permute.xlu0 %590
          %v593 = vmul.f32 %v588, %v591
          %v595 = vrot.slane %v552, 6
          %v597 = vsub.f32 %v552, %v595
          %v599 = vrot.slane %v597, 1
          %v601 = vmul.f32 %v597, %v599
          %602 = vset.pattern.permute.xlu0 6
          %603 = vperm.xlu0 %602, %v551
          %v604 = vpop.permute.xlu0 %603
          %v606 = vperm.slane %v552, 6
          %v607 = vmin.f32 %v604, %v606
          %608 = vset.pattern.permute.xlu0 4
          %609 = vperm.xlu0 %608, %v551
          %v610 = vpop.permute.xlu0 %609
          %v612 = vperm.slane %v552, 4
          %v613 = vmax.f32 %v610, %v612
          %v614 = vsub.f32 %v607, %v613
          %v615 = vmax.f32 %v614, 0.0
          %616 = vset.pattern.permute.xlu0 7
          %617 = vperm.xlu0 %616, %v551
          %v618 = vpop.permute.xlu0 %617
          %v620 = vperm.slane %v552, 7
          %v621 = vmin.f32 %v618, %v620
          %622 = vset.pattern.permute.xlu0 5
          %623 = vperm.xlu0 %622, %v551
          %v624 = vpop.permute.xlu0 %623
          %v626 = vperm.slane %v552, 5
          %v627 = vmax.f32 %v624, %v626
          %v628 = vsub.f32 %v621, %v627
          %v629 = vmax.f32 %v628, 0.0
          %v630 = vmul.f32 %v615, %v629
          %632 = vset.pattern.permute.xlu0 6
          %633 = vperm.xlu0 %632, %v593
          %v634 = vpop.permute.xlu0 %633
          %v636 = vperm.slane %v601, 6
          %v637 = vadd.f32 %v634, %v636
          %v638 = vsub.f32 %v637, %v630
          %v639 = vmax.f32 %v604, %v606
          %v640 = vmin.f32 %v610, %v612
          %v641 = vsub.f32 %v639, %v640
          %v642 = vmax.f32 %v641, 0.0
          %v643 = vmax.f32 %v618, %v620
          %v644 = vmin.f32 %v624, %v626
          %v645 = vsub.f32 %v643, %v644
          %v646 = vmax.f32 %v645, 0.0
          %v647 = vmul.f32 %v642, %v646
          %v648 = vmax.f32 %v638, 1e-07
          %v649 = vrcp.pop %v648
          %v650 = vmax.f32 %v647, 1e-07
          %v651 = vrcp.pop %v650
          %v652 = vmul.f32 %v630, %v649
          %v653 = vsub.f32 %v647, %v638
          %v654 = vmul.f32 %v653, %v651
          %v655 = vsub.f32 %v652, %v654
          %v656 = vstv %s523
          %v657 = vmul.f32 %v656, %v536
          %v658 = vstv %s524
          %v659 = vmul.f32 %v658, %v550
          %v660 = vadd.f32 %v657, %v659
          %v661 = vstv %s525
          %v662 = vmul.f32 %v661, %v584
          %v663 = vadd.f32 %v660, %v662
          %v664 = vsub.f32 0.0, %v655
          %v665 = vstv %s526
          %v666 = vmul.f32 %v665, %v664
          %v667 = vadd.f32 %v663, %v666
          %668 = vst [vmem:[%s374] sm:$0xff] %v667
        $region60: #{_padded_cost.1} parent=35 // pred_fallthru
          _
        %s669 = sand.u32 %s177, 1
        %s670 = scalar_lea.sflag [#allocation9], %s669
        %s671 = sand.u32 %s177, 1
        %s672 = smul.addr %s671, 8
        %s673 = scalar_lea.vmem [#allocation15], %s672
        // Predicated region
        $region61: #{_padded_cost.1} parent=35 // pred_check
          %p674 = pneg %p187
        $region62: #{_padded_cost.1} parent=35 // pred_check_branch
          %676 = sbr.rel (%p674) target = $region64
        $region63: #{_padded_cost.1} parent=35 // pred_region
          %678 = vsyncadd %s670, 0
          %s679 = sadd.s32 %s42, %s41
          %s680 = smul.addr %s679, 8
          %s681 = scalar_lea.hbm %s5, %s680
          %s683 = sshll.u32 %s673, 4
          %s684 = int_to_ptr.vmem [resolvable:$true] %s683
          %s685 = sshll.u32 %s681, 4
          %s686 = int_to_ptr.hbm [resolvable:$true] %s685
          %688 = dma.vmem_to_hbm [thread:$0]  %s684, 128, %s686, %s670
        $region64: #{_padded_cost.1} parent=35 // pred_fallthru
          _
      $region36: #{_padded_cost.1} parent=5 // pred_fallthru
        _
      %p689 = scmp.le.s32.totalorder 2, %s31
      // Predicated region
      $region65: #{_padded_cost.1} parent=5 // pred_check
        %p690 = pneg %p689
      $region66: #{_padded_cost.1} parent=5 // pred_check_branch
        %692 = sbr.rel (%p690) target = $region68
      $region67: #{_padded_cost.1} parent=5 // pred_region
        %s693 = ssub.s32 %s31, 2
        // Predicated region
        $region69: #{_padded_cost.1} parent=67 // pred_check
          %p694 = pneg %p193
        $region70: #{_padded_cost.1} parent=67 // pred_check_branch
          %696 = sbr.rel (%p694) target = $region72
        $region71: #{_padded_cost.1} parent=67 // pred_region
          %s697 = sand.u32 %s178, 1
          %s698 = scalar_lea.sflag [#allocation9], %s697
          %s699 = sand.u32 %s178, 1
          %s700 = smul.addr %s699, 8
          %s701 = scalar_lea.vmem [#allocation15], %s700
          %703 = dma.done %s698, 128
        $region72: #{_padded_cost.1} parent=67 // pred_fallthru
          _
      $region68: #{_padded_cost.1} parent=5 // pred_fallthru
        _
    $region6: #{_padded_cost.1} parent=1 // loop_footer
      %s35 = sadd.s32 1, %s31
    $region7: #{_padded_cost.1} parent=1 // loop_footer_branch
      %30 = sbr.rel target = $region3
    $region8: #{_padded_cost.1} parent=1 // loop_exit
      _
    %704 = vsyncpa [#allocation8], 1
    %s705 = scalar_lea.sflag [#allocation8], 1
    %706 = vsyncpa %s705, 1
    %707 = vsyncpa [#allocation11], 1
    %s708 = scalar_lea.sflag [#allocation11], 1
    %709 = vsyncpa %s708, 1
    %710 = vsyncpa [#allocation14], 1
    %s711 = scalar_lea.sflag [#allocation14], 1
    %712 = vsyncpa %s711, 1
    %713 = vsyncpa [#allocation9], 1
    %s714 = scalar_lea.sflag [#allocation9], 1
    %715 = vsyncpa %s714, 1

</llo_original>
